<compile_context>
chip_gen: v7x
topology: tpu7x:2x2x1
jax: 0.10.0
libtpu: 0.0.40
codegen_flags: <defaults>
</compile_context>

<pallas_src>
import jax
import jax.numpy as jnp
from jax.experimental import pallas as pl
from jax.experimental.pallas import tpu as pltpu

GRID_NUM = 200          # reference script: x has grid_num + 1 rows
INPUT_SIZE = 1
WIDTH = 4
LANES = 128
SUBLANES = 8
TILE = SUBLANES * LANES  # pad batch to a multiple of 1024 -> whole (8,128) vregs

# Packed-parameter layout (53 f32 scalars total).
_W_IN = 0                       # w_in[j, 0]            j = 0..3
_B_IN = _W_IN + WIDTH           # b_in[j]
_W1 = _B_IN + WIDTH             # w1[j, k] row-major    16
_B1 = _W1 + WIDTH * WIDTH       # b1[j]
_W2 = _B1 + WIDTH               # w2[j, k] row-major    16
_B2 = _W2 + WIDTH * WIDTH       # b2[j]
_W_OUT = _B2 + WIDTH            # w_out[0, k]
_B_OUT = _W_OUT + WIDTH         # b_out[0]
N_PARAMS = _B_OUT + 1           # 53


def _silu(v):
    return v * jax.nn.sigmoid(v)


def _net_kernel(p_ref, x_ref, o_ref):
    """Full forward pass on a batch-on-lanes slab.

    x_ref / o_ref: (rows, 128) f32 where each element is one sample (batch
    laid out along sublanes x lanes).  All weights/biases are scalars read
    from the packed SMEM array p_ref; each Linear is a few broadcast FMAs on
    the VPU (the real contractions are K=1 or K=4, so the MXU is pointless).
    """
    x = x_ref[...]

    # layer_in: h_j = w_in[j] * x + b_in[j]
    h = [p_ref[_W_IN + j] * x + p_ref[_B_IN + j] for j in range(WIDTH)]

    # z = silu(layer_1(h))
    z = []
    for j in range(WIDTH):
        acc = h[0] * p_ref[_W1 + WIDTH * j + 0] + p_ref[_B1 + j]
        for k in range(1, WIDTH):
            acc = acc + p_ref[_W1 + WIDTH * j + k] * h[k]
        z.append(_silu(acc))

    # z = silu(layer_2(z))
    z2 = []
    for j in range(WIDTH):
        acc = z[0] * p_ref[_W2 + WIDTH * j + 0] + p_ref[_B2 + j]
        for k in range(1, WIDTH):
            acc = acc + p_ref[_W2 + WIDTH * j + k] * z[k]
        z2.append(_silu(acc))

    # residual add
    h = [h[j] + z2[j] for j in range(WIDTH)]

    # layer_out: scalar output per sample
    out = h[0] * p_ref[_W_OUT + 0] + p_ref[_B_OUT]
    for k in range(1, WIDTH):
        out = out + h[k] * p_ref[_W_OUT + k]

    o_ref[...] = out.astype(o_ref.dtype)


def _pack_params(p):
    """Flatten all weights/biases (PyTorch layout) into one (53,) f32 array."""
    return jnp.concatenate([
        p["w_in"].reshape(-1).astype(jnp.float32),    # (4,1)  -> w_in[j,0]
        p["b_in"].reshape(-1).astype(jnp.float32),
        p["w1"].reshape(-1).astype(jnp.float32),      # (4,4)  -> w1[j,k] row-major
        p["b1"].reshape(-1).astype(jnp.float32),
        p["w2"].reshape(-1).astype(jnp.float32),
        p["b2"].reshape(-1).astype(jnp.float32),
        p["w_out"].reshape(-1).astype(jnp.float32),   # (1,4)  -> w_out[0,k]
        p["b_out"].reshape(-1).astype(jnp.float32),
    ])


@jax.jit
def net_forward(x, params):
    """x: (N, 1) float32 -> (N, 1) float32, matching Net.forward semantics."""
    n = x.shape[0]
    n_pad = ((n + TILE - 1) // TILE) * TILE
    rows = n_pad // LANES

    # batch-on-lanes slab: padded samples compute net(0) and are sliced off.
    x_slab = (jnp.zeros((n_pad,), jnp.float32)
              .at[:n].set(x[:, 0].astype(jnp.float32))
              .reshape(rows, LANES))

    packed = _pack_params(params)

    out_slab = pl.pallas_call(
        _net_kernel,
        out_shape=jax.ShapeDtypeStruct((rows, LANES), jnp.float32),
        in_specs=[
            pl.BlockSpec(memory_space=pltpu.MemorySpace.SMEM),   # packed params
            pl.BlockSpec(memory_space=pltpu.MemorySpace.VMEM),   # x slab
        ],
        out_specs=pl.BlockSpec(memory_space=pltpu.MemorySpace.VMEM),
    )(packed, x_slab)

    return out_slab.reshape(n_pad)[:n].reshape(n, 1)


def init_params(key):
    """Deterministic PyTorch-style Linear init: U(-1/sqrt(fan_in), 1/sqrt(fan_in))."""
    ks = jax.random.split(key, 8)

    def lin(kw, kb, fan_in, fan_out):
        bound = 1.0 / jnp.sqrt(jnp.float32(fan_in))
        w = jax.random.uniform(kw, (fan_out, fan_in), jnp.float32, -bound, bound)
        b = jax.random.uniform(kb, (fan_out,), jnp.float32, -bound, bound)
        return w, b

    w_in, b_in = lin(ks[0], ks[1], INPUT_SIZE, WIDTH)
    w1, b1 = lin(ks[2], ks[3], WIDTH, WIDTH)
    w2, b2 = lin(ks[4], ks[5], WIDTH, WIDTH)
    w_out, b_out = lin(ks[6], ks[7], WIDTH, 1)
    return dict(w_in=w_in, b_in=b_in, w1=w1, b1=b1,
                w2=w2, b2=b2, w_out=w_out, b_out=b_out)


def _reference(x, p):
    """Pure-JAX elementwise (f32) reference mirroring the PyTorch forward exactly."""
    h = x * p["w_in"][:, 0][None, :] + p["b_in"][None, :]                        # (N,4)
    z = _silu(jnp.sum(h[:, None, :] * p["w1"][None, :, :], axis=-1) + p["b1"])   # (N,4)
    z = _silu(jnp.sum(z[:, None, :] * p["w2"][None, :, :], axis=-1) + p["b2"])   # (N,4)
    h = h + z
    return jnp.sum(h * p["w_out"][0][None, :], axis=-1, keepdims=True) + p["b_out"]


if __name__ == "__main__":
    key = jax.random.PRNGKey(0)
    kp, kx = jax.random.split(key)

    params = init_params(kp)

    # Same shape as the reference script's input: (grid_num + 1, input_size).
    x = jnp.linspace(0.0, 1.0, GRID_NUM + 1, dtype=jnp.float32).reshape(-1, INPUT_SIZE)
    x = x + 0.01 * jax.random.normal(kx, x.shape, jnp.float32)

    out = net_forward(x, params)
    out = jax.block_until_ready(out)

    ref = _reference(x, params)
    assert out.shape == (GRID_NUM + 1, 1)
    assert jnp.allclose(out, ref, atol=1e-5, rtol=1e-5), (
        float(jnp.max(jnp.abs(out - ref))))

    print("KERNEL_OK")
</pallas_src>

<mosaic_0001>
module attributes {stable_mosaic.version = 11 : i64} {
  func.func @_net_kernel(%arg0: memref<53xf32, #tpu.memory_space<smem>>, %arg1: memref<8x128xf32, #tpu.memory_space<vmem>>, %arg2: memref<8x128xf32, #tpu.memory_space<vmem>>) attributes {dimension_semantics = [], scalar_prefetch = 0 : i64, scratch_operands = 0 : i64, tpu.core_type = #tpu.core_type<tc>} {
    %c0 = arith.constant 0 : index
    %c0_0 = arith.constant 0 : index
    %0 = vector.load %arg1[%c0, %c0_0] : memref<8x128xf32, #tpu.memory_space<vmem>>, vector<8x128xf32>
    %c0_1 = arith.constant 0 : index
    %1 = memref.load %arg0[%c0_1] : memref<53xf32, #tpu.memory_space<smem>>
    %2 = vector.broadcast %1 : f32 to vector<8x128xf32>
    %3 = arith.mulf %2, %0 : vector<8x128xf32>
    %c4 = arith.constant 4 : index
    %4 = memref.load %arg0[%c4] : memref<53xf32, #tpu.memory_space<smem>>
    %5 = vector.broadcast %4 : f32 to vector<8x128xf32>
    %6 = arith.addf %3, %5 : vector<8x128xf32>
    %c1 = arith.constant 1 : index
    %7 = memref.load %arg0[%c1] : memref<53xf32, #tpu.memory_space<smem>>
    %8 = vector.broadcast %7 : f32 to vector<8x128xf32>
    %9 = arith.mulf %8, %0 : vector<8x128xf32>
    %c5 = arith.constant 5 : index
    %10 = memref.load %arg0[%c5] : memref<53xf32, #tpu.memory_space<smem>>
    %11 = vector.broadcast %10 : f32 to vector<8x128xf32>
    %12 = arith.addf %9, %11 : vector<8x128xf32>
    %c2 = arith.constant 2 : index
    %13 = memref.load %arg0[%c2] : memref<53xf32, #tpu.memory_space<smem>>
    %14 = vector.broadcast %13 : f32 to vector<8x128xf32>
    %15 = arith.mulf %14, %0 : vector<8x128xf32>
    %c6 = arith.constant 6 : index
    %16 = memref.load %arg0[%c6] : memref<53xf32, #tpu.memory_space<smem>>
    %17 = vector.broadcast %16 : f32 to vector<8x128xf32>
    %18 = arith.addf %15, %17 : vector<8x128xf32>
    %c3 = arith.constant 3 : index
    %19 = memref.load %arg0[%c3] : memref<53xf32, #tpu.memory_space<smem>>
    %20 = vector.broadcast %19 : f32 to vector<8x128xf32>
    %21 = arith.mulf %20, %0 : vector<8x128xf32>
    %c7 = arith.constant 7 : index
    %22 = memref.load %arg0[%c7] : memref<53xf32, #tpu.memory_space<smem>>
    %23 = vector.broadcast %22 : f32 to vector<8x128xf32>
    %24 = arith.addf %21, %23 : vector<8x128xf32>
    %c8 = arith.constant 8 : index
    %25 = memref.load %arg0[%c8] : memref<53xf32, #tpu.memory_space<smem>>
    %26 = vector.broadcast %25 : f32 to vector<8x128xf32>
    %27 = arith.mulf %6, %26 : vector<8x128xf32>
    %c24 = arith.constant 24 : index
    %28 = memref.load %arg0[%c24] : memref<53xf32, #tpu.memory_space<smem>>
    %29 = vector.broadcast %28 : f32 to vector<8x128xf32>
    %30 = arith.addf %27, %29 : vector<8x128xf32>
    %c9 = arith.constant 9 : index
    %31 = memref.load %arg0[%c9] : memref<53xf32, #tpu.memory_space<smem>>
    %32 = vector.broadcast %31 : f32 to vector<8x128xf32>
    %33 = arith.mulf %32, %12 : vector<8x128xf32>
    %34 = arith.addf %30, %33 : vector<8x128xf32>
    %c10 = arith.constant 10 : index
    %35 = memref.load %arg0[%c10] : memref<53xf32, #tpu.memory_space<smem>>
    %36 = vector.broadcast %35 : f32 to vector<8x128xf32>
    %37 = arith.mulf %36, %18 : vector<8x128xf32>
    %38 = arith.addf %34, %37 : vector<8x128xf32>
    %c11 = arith.constant 11 : index
    %39 = memref.load %arg0[%c11] : memref<53xf32, #tpu.memory_space<smem>>
    %40 = vector.broadcast %39 : f32 to vector<8x128xf32>
    %41 = arith.mulf %40, %24 : vector<8x128xf32>
    %42 = arith.addf %38, %41 : vector<8x128xf32>
    %43 = arith.negf %42 : vector<8x128xf32>
    %44 = math.exp %43 : vector<8x128xf32>
    %cst = arith.constant 1.000000e+00 : f32
    %45 = vector.broadcast %cst : f32 to vector<8x128xf32>
    %46 = arith.addf %45, %44 : vector<8x128xf32>
    %47 = arith.divf %45, %46 : vector<8x128xf32>
    %48 = arith.mulf %42, %47 : vector<8x128xf32>
    %c12 = arith.constant 12 : index
    %49 = memref.load %arg0[%c12] : memref<53xf32, #tpu.memory_space<smem>>
    %50 = vector.broadcast %49 : f32 to vector<8x128xf32>
    %51 = arith.mulf %6, %50 : vector<8x128xf32>
    %c25 = arith.constant 25 : index
    %52 = memref.load %arg0[%c25] : memref<53xf32, #tpu.memory_space<smem>>
    %53 = vector.broadcast %52 : f32 to vector<8x128xf32>
    %54 = arith.addf %51, %53 : vector<8x128xf32>
    %c13 = arith.constant 13 : index
    %55 = memref.load %arg0[%c13] : memref<53xf32, #tpu.memory_space<smem>>
    %56 = vector.broadcast %55 : f32 to vector<8x128xf32>
    %57 = arith.mulf %56, %12 : vector<8x128xf32>
    %58 = arith.addf %54, %57 : vector<8x128xf32>
    %c14 = arith.constant 14 : index
    %59 = memref.load %arg0[%c14] : memref<53xf32, #tpu.memory_space<smem>>
    %60 = vector.broadcast %59 : f32 to vector<8x128xf32>
    %61 = arith.mulf %60, %18 : vector<8x128xf32>
    %62 = arith.addf %58, %61 : vector<8x128xf32>
    %c15 = arith.constant 15 : index
    %63 = memref.load %arg0[%c15] : memref<53xf32, #tpu.memory_space<smem>>
    %64 = vector.broadcast %63 : f32 to vector<8x128xf32>
    %65 = arith.mulf %64, %24 : vector<8x128xf32>
    %66 = arith.addf %62, %65 : vector<8x128xf32>
    %67 = arith.negf %66 : vector<8x128xf32>
    %68 = math.exp %67 : vector<8x128xf32>
    %cst_2 = arith.constant 1.000000e+00 : f32
    %69 = vector.broadcast %cst_2 : f32 to vector<8x128xf32>
    %70 = arith.addf %69, %68 : vector<8x128xf32>
    %71 = arith.divf %69, %70 : vector<8x128xf32>
    %72 = arith.mulf %66, %71 : vector<8x128xf32>
    %c16 = arith.constant 16 : index
    %73 = memref.load %arg0[%c16] : memref<53xf32, #tpu.memory_space<smem>>
    %74 = vector.broadcast %73 : f32 to vector<8x128xf32>
    %75 = arith.mulf %6, %74 : vector<8x128xf32>
    %c26 = arith.constant 26 : index
    %76 = memref.load %arg0[%c26] : memref<53xf32, #tpu.memory_space<smem>>
    %77 = vector.broadcast %76 : f32 to vector<8x128xf32>
    %78 = arith.addf %75, %77 : vector<8x128xf32>
    %c17 = arith.constant 17 : index
    %79 = memref.load %arg0[%c17] : memref<53xf32, #tpu.memory_space<smem>>
    %80 = vector.broadcast %79 : f32 to vector<8x128xf32>
    %81 = arith.mulf %80, %12 : vector<8x128xf32>
    %82 = arith.addf %78, %81 : vector<8x128xf32>
    %c18 = arith.constant 18 : index
    %83 = memref.load %arg0[%c18] : memref<53xf32, #tpu.memory_space<smem>>
    %84 = vector.broadcast %83 : f32 to vector<8x128xf32>
    %85 = arith.mulf %84, %18 : vector<8x128xf32>
    %86 = arith.addf %82, %85 : vector<8x128xf32>
    %c19 = arith.constant 19 : index
    %87 = memref.load %arg0[%c19] : memref<53xf32, #tpu.memory_space<smem>>
    %88 = vector.broadcast %87 : f32 to vector<8x128xf32>
    %89 = arith.mulf %88, %24 : vector<8x128xf32>
    %90 = arith.addf %86, %89 : vector<8x128xf32>
    %91 = arith.negf %90 : vector<8x128xf32>
    %92 = math.exp %91 : vector<8x128xf32>
    %cst_3 = arith.constant 1.000000e+00 : f32
    %93 = vector.broadcast %cst_3 : f32 to vector<8x128xf32>
    %94 = arith.addf %93, %92 : vector<8x128xf32>
    %95 = arith.divf %93, %94 : vector<8x128xf32>
    %96 = arith.mulf %90, %95 : vector<8x128xf32>
    %c20 = arith.constant 20 : index
    %97 = memref.load %arg0[%c20] : memref<53xf32, #tpu.memory_space<smem>>
    %98 = vector.broadcast %97 : f32 to vector<8x128xf32>
    %99 = arith.mulf %6, %98 : vector<8x128xf32>
    %c27 = arith.constant 27 : index
    %100 = memref.load %arg0[%c27] : memref<53xf32, #tpu.memory_space<smem>>
    %101 = vector.broadcast %100 : f32 to vector<8x128xf32>
    %102 = arith.addf %99, %101 : vector<8x128xf32>
    %c21 = arith.constant 21 : index
    %103 = memref.load %arg0[%c21] : memref<53xf32, #tpu.memory_space<smem>>
    %104 = vector.broadcast %103 : f32 to vector<8x128xf32>
    %105 = arith.mulf %104, %12 : vector<8x128xf32>
    %106 = arith.addf %102, %105 : vector<8x128xf32>
    %c22 = arith.constant 22 : index
    %107 = memref.load %arg0[%c22] : memref<53xf32, #tpu.memory_space<smem>>
    %108 = vector.broadcast %107 : f32 to vector<8x128xf32>
    %109 = arith.mulf %108, %18 : vector<8x128xf32>
    %110 = arith.addf %106, %109 : vector<8x128xf32>
    %c23 = arith.constant 23 : index
    %111 = memref.load %arg0[%c23] : memref<53xf32, #tpu.memory_space<smem>>
    %112 = vector.broadcast %111 : f32 to vector<8x128xf32>
    %113 = arith.mulf %112, %24 : vector<8x128xf32>
    %114 = arith.addf %110, %113 : vector<8x128xf32>
    %115 = arith.negf %114 : vector<8x128xf32>
    %116 = math.exp %115 : vector<8x128xf32>
    %cst_4 = arith.constant 1.000000e+00 : f32
    %117 = vector.broadcast %cst_4 : f32 to vector<8x128xf32>
    %118 = arith.addf %117, %116 : vector<8x128xf32>
    %119 = arith.divf %117, %118 : vector<8x128xf32>
    %120 = arith.mulf %114, %119 : vector<8x128xf32>
    %c28 = arith.constant 28 : index
    %121 = memref.load %arg0[%c28] : memref<53xf32, #tpu.memory_space<smem>>
    %122 = vector.broadcast %121 : f32 to vector<8x128xf32>
    %123 = arith.mulf %48, %122 : vector<8x128xf32>
    %c44 = arith.constant 44 : index
    %124 = memref.load %arg0[%c44] : memref<53xf32, #tpu.memory_space<smem>>
    %125 = vector.broadcast %124 : f32 to vector<8x128xf32>
    %126 = arith.addf %123, %125 : vector<8x128xf32>
    %c29 = arith.constant 29 : index
    %127 = memref.load %arg0[%c29] : memref<53xf32, #tpu.memory_space<smem>>
    %128 = vector.broadcast %127 : f32 to vector<8x128xf32>
    %129 = arith.mulf %128, %72 : vector<8x128xf32>
    %130 = arith.addf %126, %129 : vector<8x128xf32>
    %c30 = arith.constant 30 : index
    %131 = memref.load %arg0[%c30] : memref<53xf32, #tpu.memory_space<smem>>
    %132 = vector.broadcast %131 : f32 to vector<8x128xf32>
    %133 = arith.mulf %132, %96 : vector<8x128xf32>
    %134 = arith.addf %130, %133 : vector<8x128xf32>
    %c31 = arith.constant 31 : index
    %135 = memref.load %arg0[%c31] : memref<53xf32, #tpu.memory_space<smem>>
    %136 = vector.broadcast %135 : f32 to vector<8x128xf32>
    %137 = arith.mulf %136, %120 : vector<8x128xf32>
    %138 = arith.addf %134, %137 : vector<8x128xf32>
    %139 = arith.negf %138 : vector<8x128xf32>
    %140 = math.exp %139 : vector<8x128xf32>
    %cst_5 = arith.constant 1.000000e+00 : f32
    %141 = vector.broadcast %cst_5 : f32 to vector<8x128xf32>
    %142 = arith.addf %141, %140 : vector<8x128xf32>
    %143 = arith.divf %141, %142 : vector<8x128xf32>
    %144 = arith.mulf %138, %143 : vector<8x128xf32>
    %c32 = arith.constant 32 : index
    %145 = memref.load %arg0[%c32] : memref<53xf32, #tpu.memory_space<smem>>
    %146 = vector.broadcast %145 : f32 to vector<8x128xf32>
    %147 = arith.mulf %48, %146 : vector<8x128xf32>
    %c45 = arith.constant 45 : index
    %148 = memref.load %arg0[%c45] : memref<53xf32, #tpu.memory_space<smem>>
    %149 = vector.broadcast %148 : f32 to vector<8x128xf32>
    %150 = arith.addf %147, %149 : vector<8x128xf32>
    %c33 = arith.constant 33 : index
    %151 = memref.load %arg0[%c33] : memref<53xf32, #tpu.memory_space<smem>>
    %152 = vector.broadcast %151 : f32 to vector<8x128xf32>
    %153 = arith.mulf %152, %72 : vector<8x128xf32>
    %154 = arith.addf %150, %153 : vector<8x128xf32>
    %c34 = arith.constant 34 : index
    %155 = memref.load %arg0[%c34] : memref<53xf32, #tpu.memory_space<smem>>
    %156 = vector.broadcast %155 : f32 to vector<8x128xf32>
    %157 = arith.mulf %156, %96 : vector<8x128xf32>
    %158 = arith.addf %154, %157 : vector<8x128xf32>
    %c35 = arith.constant 35 : index
    %159 = memref.load %arg0[%c35] : memref<53xf32, #tpu.memory_space<smem>>
    %160 = vector.broadcast %159 : f32 to vector<8x128xf32>
    %161 = arith.mulf %160, %120 : vector<8x128xf32>
    %162 = arith.addf %158, %161 : vector<8x128xf32>
    %163 = arith.negf %162 : vector<8x128xf32>
    %164 = math.exp %163 : vector<8x128xf32>
    %cst_6 = arith.constant 1.000000e+00 : f32
    %165 = vector.broadcast %cst_6 : f32 to vector<8x128xf32>
    %166 = arith.addf %165, %164 : vector<8x128xf32>
    %167 = arith.divf %165, %166 : vector<8x128xf32>
    %168 = arith.mulf %162, %167 : vector<8x128xf32>
    %c36 = arith.constant 36 : index
    %169 = memref.load %arg0[%c36] : memref<53xf32, #tpu.memory_space<smem>>
    %170 = vector.broadcast %169 : f32 to vector<8x128xf32>
    %171 = arith.mulf %48, %170 : vector<8x128xf32>
    %c46 = arith.constant 46 : index
    %172 = memref.load %arg0[%c46] : memref<53xf32, #tpu.memory_space<smem>>
    %173 = vector.broadcast %172 : f32 to vector<8x128xf32>
    %174 = arith.addf %171, %173 : vector<8x128xf32>
    %c37 = arith.constant 37 : index
    %175 = memref.load %arg0[%c37] : memref<53xf32, #tpu.memory_space<smem>>
    %176 = vector.broadcast %175 : f32 to vector<8x128xf32>
    %177 = arith.mulf %176, %72 : vector<8x128xf32>
    %178 = arith.addf %174, %177 : vector<8x128xf32>
    %c38 = arith.constant 38 : index
    %179 = memref.load %arg0[%c38] : memref<53xf32, #tpu.memory_space<smem>>
    %180 = vector.broadcast %179 : f32 to vector<8x128xf32>
    %181 = arith.mulf %180, %96 : vector<8x128xf32>
    %182 = arith.addf %178, %181 : vector<8x128xf32>
    %c39 = arith.constant 39 : index
    %183 = memref.load %arg0[%c39] : memref<53xf32, #tpu.memory_space<smem>>
    %184 = vector.broadcast %183 : f32 to vector<8x128xf32>
    %185 = arith.mulf %184, %120 : vector<8x128xf32>
    %186 = arith.addf %182, %185 : vector<8x128xf32>
    %187 = arith.negf %186 : vector<8x128xf32>
    %188 = math.exp %187 : vector<8x128xf32>
    %cst_7 = arith.constant 1.000000e+00 : f32
    %189 = vector.broadcast %cst_7 : f32 to vector<8x128xf32>
    %190 = arith.addf %189, %188 : vector<8x128xf32>
    %191 = arith.divf %189, %190 : vector<8x128xf32>
    %192 = arith.mulf %186, %191 : vector<8x128xf32>
    %c40 = arith.constant 40 : index
    %193 = memref.load %arg0[%c40] : memref<53xf32, #tpu.memory_space<smem>>
    %194 = vector.broadcast %193 : f32 to vector<8x128xf32>
    %195 = arith.mulf %48, %194 : vector<8x128xf32>
    %c47 = arith.constant 47 : index
    %196 = memref.load %arg0[%c47] : memref<53xf32, #tpu.memory_space<smem>>
    %197 = vector.broadcast %196 : f32 to vector<8x128xf32>
    %198 = arith.addf %195, %197 : vector<8x128xf32>
    %c41 = arith.constant 41 : index
    %199 = memref.load %arg0[%c41] : memref<53xf32, #tpu.memory_space<smem>>
    %200 = vector.broadcast %199 : f32 to vector<8x128xf32>
    %201 = arith.mulf %200, %72 : vector<8x128xf32>
    %202 = arith.addf %198, %201 : vector<8x128xf32>
    %c42 = arith.constant 42 : index
    %203 = memref.load %arg0[%c42] : memref<53xf32, #tpu.memory_space<smem>>
    %204 = vector.broadcast %203 : f32 to vector<8x128xf32>
    %205 = arith.mulf %204, %96 : vector<8x128xf32>
    %206 = arith.addf %202, %205 : vector<8x128xf32>
    %c43 = arith.constant 43 : index
    %207 = memref.load %arg0[%c43] : memref<53xf32, #tpu.memory_space<smem>>
    %208 = vector.broadcast %207 : f32 to vector<8x128xf32>
    %209 = arith.mulf %208, %120 : vector<8x128xf32>
    %210 = arith.addf %206, %209 : vector<8x128xf32>
    %211 = arith.negf %210 : vector<8x128xf32>
    %212 = math.exp %211 : vector<8x128xf32>
    %cst_8 = arith.constant 1.000000e+00 : f32
    %213 = vector.broadcast %cst_8 : f32 to vector<8x128xf32>
    %214 = arith.addf %213, %212 : vector<8x128xf32>
    %215 = arith.divf %213, %214 : vector<8x128xf32>
    %216 = arith.mulf %210, %215 : vector<8x128xf32>
    %217 = arith.addf %6, %144 : vector<8x128xf32>
    %218 = arith.addf %12, %168 : vector<8x128xf32>
    %219 = arith.addf %18, %192 : vector<8x128xf32>
    %220 = arith.addf %24, %216 : vector<8x128xf32>
    %c48 = arith.constant 48 : index
    %221 = memref.load %arg0[%c48] : memref<53xf32, #tpu.memory_space<smem>>
    %222 = vector.broadcast %221 : f32 to vector<8x128xf32>
    %223 = arith.mulf %217, %222 : vector<8x128xf32>
    %c52 = arith.constant 52 : index
    %224 = memref.load %arg0[%c52] : memref<53xf32, #tpu.memory_space<smem>>
    %225 = vector.broadcast %224 : f32 to vector<8x128xf32>
    %226 = arith.addf %223, %225 : vector<8x128xf32>
    %c49 = arith.constant 49 : index
    %227 = memref.load %arg0[%c49] : memref<53xf32, #tpu.memory_space<smem>>
    %228 = vector.broadcast %227 : f32 to vector<8x128xf32>
    %229 = arith.mulf %218, %228 : vector<8x128xf32>
    %230 = arith.addf %226, %229 : vector<8x128xf32>
    %c50 = arith.constant 50 : index
    %231 = memref.load %arg0[%c50] : memref<53xf32, #tpu.memory_space<smem>>
    %232 = vector.broadcast %231 : f32 to vector<8x128xf32>
    %233 = arith.mulf %219, %232 : vector<8x128xf32>
    %234 = arith.addf %230, %233 : vector<8x128xf32>
    %c51 = arith.constant 51 : index
    %235 = memref.load %arg0[%c51] : memref<53xf32, #tpu.memory_space<smem>>
    %236 = vector.broadcast %235 : f32 to vector<8x128xf32>
    %237 = arith.mulf %220, %236 : vector<8x128xf32>
    %238 = arith.addf %234, %237 : vector<8x128xf32>
    %c0_9 = arith.constant 0 : index
    %c0_10 = arith.constant 0 : index
    %239 = vector.load %arg2[%c0_9, %c0_10] : memref<8x128xf32, #tpu.memory_space<vmem>>, vector<8x128xf32>
    tpu.vector_store %arg2[%c0_9, %c0_10], %238 {strides = array<i32>} : memref<8x128xf32, #tpu.memory_space<vmem>>, vector<8x128xf32>,
    return
  }
}

</mosaic_0001>

<llo_original>
// kernel: net_forward.1
$region0: #{net_forward.1}
  #allocation0 [shape = 'u32[]', space=smem, size = 0x4, offset = 0x4, fixed_abs, tag = 'smem constant byte address 0x4 - core index']
  #allocation1 [shape = 'u32[144,128]{1,0:T(1,128)}', space=vmem, size = 0x12000, scoped, tag = 'internal scratch']
  %s0 = inlined_call_operand.vmem [shape: f32[53], index: 0, kind: input, shape index: {}]
  %s1 = inlined_call_operand.vmem [shape: f32[8,128], index: 1, kind: input, shape index: {}]
  %s2 = inlined_call_operand.vmem [shape: f32[8,128], index: 2, kind: output, shape index: {}]
  %s3 = sld [smem:[#allocation0]]
  $region22: #{net_forward.1} parent=0
    _
  %s5 = ssub.s32 1, %s3
  %s6 = scalar_select 0, %s5, %s3
  $region1: #{net_forward.1} parent=0
    #allocation2 [shape = 'u8[512]{0}', space=smem, size = 0x200, scoped, tag = 'input window, operand 0, single buffered']
    #allocation3 [shape = 's32[1]{0}', space=sflag, size = 0x4, scoped, tag = 'scoped memory for net_forward.1']
    %7 = vsyncpa [#allocation3], 0
    // Predicated region
    $region2: #{net_forward.1} parent=1 // pred_check
      _
    $region3: #{net_forward.1} parent=1 // pred_check_branch
      %9 = sbr.rel (0) target = $region5
    $region4: #{net_forward.1} parent=1 // pred_region
      %s11 = ssub.s32 16, 16
      %12 = vsyncadd [#allocation3], %s11
      %s14 = sshll.u32 %s0, 4
      %s15 = int_to_ptr.vmem [resolvable:$true] %s14
      %17 = dma.vmem_to_smem %s15, 16, [#allocation2], [#allocation3]
    $region5: #{net_forward.1} parent=1 // pred_fallthru
      _
    // Predicated region
    $region6: #{net_forward.1} parent=1 // pred_check
      _
    $region7: #{net_forward.1} parent=1 // pred_check_branch
      %19 = sbr.rel (0) target = $region9
    $region8: #{net_forward.1} parent=1 // pred_region
      _
    $region9: #{net_forward.1} parent=1 // pred_fallthru
      _
    // Predicated region
    $region10: #{net_forward.1} parent=1 // pred_check
      _
    $region11: #{net_forward.1} parent=1 // pred_check_branch
      %21 = sbr.rel (0) target = $region13
    $region12: #{net_forward.1} parent=1 // pred_region
      %22 = dma.done [#allocation3], 16
    $region13: #{net_forward.1} parent=1 // pred_fallthru
      _
    %23 = sfence
    %v24 = vld [vmem:[%s1] sm:$0xff]
    %s25 = sld [smem:[#allocation2]]
    %v26 = vstv %s25
    %v27 = vmul.f32 %v26, %v24
    %s28 = sld [smem:[#allocation2 + $0x4]]
    %v29 = vstv %s28
    %v30 = vadd.f32 %v27, %v29
    %s31 = sld [smem:[#allocation2 + $0x1]]
    %v32 = vstv %s31
    %v33 = vmul.f32 %v32, %v24
    %s34 = sld [smem:[#allocation2 + $0x5]]
    %v35 = vstv %s34
    %v36 = vadd.f32 %v33, %v35
    %s37 = sld [smem:[#allocation2 + $0x2]]
    %v38 = vstv %s37
    %v39 = vmul.f32 %v38, %v24
    %s40 = sld [smem:[#allocation2 + $0x6]]
    %v41 = vstv %s40
    %v42 = vadd.f32 %v39, %v41
    %s43 = sld [smem:[#allocation2 + $0x3]]
    %v44 = vstv %s43
    %v45 = vmul.f32 %v44, %v24
    %s46 = sld [smem:[#allocation2 + $0x7]]
    %v47 = vstv %s46
    %v48 = vadd.f32 %v45, %v47
    %s49 = sld [smem:[#allocation2 + $0x8]]
    %v50 = vstv %s49
    %v51 = vmul.f32 %v30, %v50
    %s52 = sld [smem:[#allocation2 + $0x18]]
    %v53 = vstv %s52
    %v54 = vadd.f32 %v51, %v53
    %s55 = sld [smem:[#allocation2 + $0x9]]
    %v56 = vstv %s55
    %v57 = vmul.f32 %v56, %v36
    %v58 = vadd.f32 %v54, %v57
    %s59 = sld [smem:[#allocation2 + $0xa]]
    %v60 = vstv %s59
    %v61 = vmul.f32 %v60, %v42
    %v62 = vadd.f32 %v58, %v61
    %s63 = sld [smem:[#allocation2 + $0xb]]
    %v64 = vstv %s63
    %v65 = vmul.f32 %v64, %v48
    %v66 = vadd.f32 %v62, %v65
    %v67 = vxor.u32 %v66, 2147483648
    %v68 = vmul.f32 %v67, 1.442695
    %v69 = vpow.pop %v68
    %v70 = vadd.f32 %v69, 1.0
    %v71 = vrcp.pop %v70
    %v72 = vmul.f32 1.0, %v71
    %v73 = vmul.f32 %v66, %v72
    %s74 = sld [smem:[#allocation2 + $0xc]]
    %v75 = vstv %s74
    %v76 = vmul.f32 %v30, %v75
    %s77 = sld [smem:[#allocation2 + $0x19]]
    %v78 = vstv %s77
    %v79 = vadd.f32 %v76, %v78
    %s80 = sld [smem:[#allocation2 + $0xd]]
    %v81 = vstv %s80
    %v82 = vmul.f32 %v81, %v36
    %v83 = vadd.f32 %v79, %v82
    %s84 = sld [smem:[#allocation2 + $0xe]]
    %v85 = vstv %s84
    %v86 = vmul.f32 %v85, %v42
    %v87 = vadd.f32 %v83, %v86
    %s88 = sld [smem:[#allocation2 + $0xf]]
    %v89 = vstv %s88
    %v90 = vmul.f32 %v89, %v48
    %v91 = vadd.f32 %v87, %v90
    %v92 = vxor.u32 %v91, 2147483648
    %v93 = vmul.f32 %v92, 1.442695
    %v94 = vpow.pop %v93
    %v95 = vadd.f32 %v94, 1.0
    %v96 = vrcp.pop %v95
    %v97 = vmul.f32 1.0, %v96
    %v98 = vmul.f32 %v91, %v97
    %s99 = sld [smem:[#allocation2 + $0x10]]
    %v100 = vstv %s99
    %v101 = vmul.f32 %v30, %v100
    %s102 = sld [smem:[#allocation2 + $0x1a]]
    %v103 = vstv %s102
    %v104 = vadd.f32 %v101, %v103
    %s105 = sld [smem:[#allocation2 + $0x11]]
    %v106 = vstv %s105
    %v107 = vmul.f32 %v106, %v36
    %v108 = vadd.f32 %v104, %v107
    %s109 = sld [smem:[#allocation2 + $0x12]]
    %v110 = vstv %s109
    %v111 = vmul.f32 %v110, %v42
    %v112 = vadd.f32 %v108, %v111
    %s113 = sld [smem:[#allocation2 + $0x13]]
    %v114 = vstv %s113
    %v115 = vmul.f32 %v114, %v48
    %v116 = vadd.f32 %v112, %v115
    %v117 = vxor.u32 %v116, 2147483648
    %v118 = vmul.f32 %v117, 1.442695
    %v119 = vpow.pop %v118
    %v120 = vadd.f32 %v119, 1.0
    %v121 = vrcp.pop %v120
    %v122 = vmul.f32 1.0, %v121
    %v123 = vmul.f32 %v116, %v122
    %s124 = sld [smem:[#allocation2 + $0x14]]
    %v125 = vstv %s124
    %v126 = vmul.f32 %v30, %v125
    %s127 = sld [smem:[#allocation2 + $0x1b]]
    %v128 = vstv %s127
    %v129 = vadd.f32 %v126, %v128
    %s130 = sld [smem:[#allocation2 + $0x15]]
    %v131 = vstv %s130
    %v132 = vmul.f32 %v131, %v36
    %v133 = vadd.f32 %v129, %v132
    %s134 = sld [smem:[#allocation2 + $0x16]]
    %v135 = vstv %s134
    %v136 = vmul.f32 %v135, %v42
    %v137 = vadd.f32 %v133, %v136
    %s138 = sld [smem:[#allocation2 + $0x17]]
    %v139 = vstv %s138
    %v140 = vmul.f32 %v139, %v48
    %v141 = vadd.f32 %v137, %v140
    %v142 = vxor.u32 %v141, 2147483648
    %v143 = vmul.f32 %v142, 1.442695
    %v144 = vpow.pop %v143
    %v145 = vadd.f32 %v144, 1.0
    %v146 = vrcp.pop %v145
    %v147 = vmul.f32 1.0, %v146
    %v148 = vmul.f32 %v141, %v147
    %s149 = sld [smem:[#allocation2 + $0x1c]]
    %v150 = vstv %s149
    %v151 = vmul.f32 %v73, %v150
    %s152 = sld [smem:[#allocation2 + $0x2c]]
    %v153 = vstv %s152
    %v154 = vadd.f32 %v151, %v153
    %s155 = sld [smem:[#allocation2 + $0x1d]]
    %v156 = vstv %s155
    %v157 = vmul.f32 %v156, %v98
    %v158 = vadd.f32 %v154, %v157
    %s159 = sld [smem:[#allocation2 + $0x1e]]
    %v160 = vstv %s159
    %v161 = vmul.f32 %v160, %v123
    %v162 = vadd.f32 %v158, %v161
    %s163 = sld [smem:[#allocation2 + $0x1f]]
    %v164 = vstv %s163
    %v165 = vmul.f32 %v164, %v148
    %v166 = vadd.f32 %v162, %v165
    %v167 = vxor.u32 %v166, 2147483648
    %v168 = vmul.f32 %v167, 1.442695
    %v169 = vpow.pop %v168
    %v170 = vadd.f32 %v169, 1.0
    %v171 = vrcp.pop %v170
    %v172 = vmul.f32 1.0, %v171
    %v173 = vmul.f32 %v166, %v172
    %s174 = sld [smem:[#allocation2 + $0x20]]
    %v175 = vstv %s174
    %v176 = vmul.f32 %v73, %v175
    %s177 = sld [smem:[#allocation2 + $0x2d]]
    %v178 = vstv %s177
    %v179 = vadd.f32 %v176, %v178
    %s180 = sld [smem:[#allocation2 + $0x21]]
    %v181 = vstv %s180
    %v182 = vmul.f32 %v181, %v98
    %v183 = vadd.f32 %v179, %v182
    %s184 = sld [smem:[#allocation2 + $0x22]]
    %v185 = vstv %s184
    %v186 = vmul.f32 %v185, %v123
    %v187 = vadd.f32 %v183, %v186
    %s188 = sld [smem:[#allocation2 + $0x23]]
    %v189 = vstv %s188
    %v190 = vmul.f32 %v189, %v148
    %v191 = vadd.f32 %v187, %v190
    %v192 = vxor.u32 %v191, 2147483648
    %v193 = vmul.f32 %v192, 1.442695
    %v194 = vpow.pop %v193
    %v195 = vadd.f32 %v194, 1.0
    %v196 = vrcp.pop %v195
    %v197 = vmul.f32 1.0, %v196
    %v198 = vmul.f32 %v191, %v197
    %s199 = sld [smem:[#allocation2 + $0x24]]
    %v200 = vstv %s199
    %v201 = vmul.f32 %v73, %v200
    %s202 = sld [smem:[#allocation2 + $0x2e]]
    %v203 = vstv %s202
    %v204 = vadd.f32 %v201, %v203
    %s205 = sld [smem:[#allocation2 + $0x25]]
    %v206 = vstv %s205
    %v207 = vmul.f32 %v206, %v98
    %v208 = vadd.f32 %v204, %v207
    %s209 = sld [smem:[#allocation2 + $0x26]]
    %v210 = vstv %s209
    %v211 = vmul.f32 %v210, %v123
    %v212 = vadd.f32 %v208, %v211
    %s213 = sld [smem:[#allocation2 + $0x27]]
    %v214 = vstv %s213
    %v215 = vmul.f32 %v214, %v148
    %v216 = vadd.f32 %v212, %v215
    %v217 = vxor.u32 %v216, 2147483648
    %v218 = vmul.f32 %v217, 1.442695
    %v219 = vpow.pop %v218
    %v220 = vadd.f32 %v219, 1.0
    %v221 = vrcp.pop %v220
    %v222 = vmul.f32 1.0, %v221
    %v223 = vmul.f32 %v216, %v222
    %s224 = sld [smem:[#allocation2 + $0x28]]
    %v225 = vstv %s224
    %v226 = vmul.f32 %v73, %v225
    %s227 = sld [smem:[#allocation2 + $0x2f]]
    %v228 = vstv %s227
    %v229 = vadd.f32 %v226, %v228
    %s230 = sld [smem:[#allocation2 + $0x29]]
    %v231 = vstv %s230
    %v232 = vmul.f32 %v231, %v98
    %v233 = vadd.f32 %v229, %v232
    %s234 = sld [smem:[#allocation2 + $0x2a]]
    %v235 = vstv %s234
    %v236 = vmul.f32 %v235, %v123
    %v237 = vadd.f32 %v233, %v236
    %s238 = sld [smem:[#allocation2 + $0x2b]]
    %v239 = vstv %s238
    %v240 = vmul.f32 %v239, %v148
    %v241 = vadd.f32 %v237, %v240
    %v242 = vxor.u32 %v241, 2147483648
    %v243 = vmul.f32 %v242, 1.442695
    %v244 = vpow.pop %v243
    %v245 = vadd.f32 %v244, 1.0
    %v246 = vrcp.pop %v245
    %v247 = vmul.f32 1.0, %v246
    %v248 = vmul.f32 %v241, %v247
    %v249 = vadd.f32 %v30, %v173
    %v250 = vadd.f32 %v36, %v198
    %v251 = vadd.f32 %v42, %v223
    %v252 = vadd.f32 %v48, %v248
    %s253 = sld [smem:[#allocation2 + $0x30]]
    %v254 = vstv %s253
    %v255 = vmul.f32 %v249, %v254
    %s256 = sld [smem:[#allocation2 + $0x34]]
    %v257 = vstv %s256
    %v258 = vadd.f32 %v255, %v257
    %s259 = sld [smem:[#allocation2 + $0x31]]
    %v260 = vstv %s259
    %v261 = vmul.f32 %v250, %v260
    %v262 = vadd.f32 %v258, %v261
    %s263 = sld [smem:[#allocation2 + $0x32]]
    %v264 = vstv %s263
    %v265 = vmul.f32 %v251, %v264
    %v266 = vadd.f32 %v262, %v265
    %s267 = sld [smem:[#allocation2 + $0x33]]
    %v268 = vstv %s267
    %v269 = vmul.f32 %v252, %v268
    %v270 = vadd.f32 %v266, %v269
    %271 = vst [vmem:[%s2] sm:$0xff] %v270
    // Predicated region
    $region14: #{net_forward.1} parent=1 // pred_check
      _
    $region15: #{net_forward.1} parent=1 // pred_check_branch
      %273 = sbr.rel (0) target = $region17
    $region16: #{net_forward.1} parent=1 // pred_region
      _
    $region17: #{net_forward.1} parent=1 // pred_fallthru
      _
    // Predicated region
    $region18: #{net_forward.1} parent=1 // pred_check
      _
    $region19: #{net_forward.1} parent=1 // pred_check_branch
      %275 = sbr.rel (0) target = $region21
    $region20: #{net_forward.1} parent=1 // pred_region
      _
    $region21: #{net_forward.1} parent=1 // pred_fallthru
      _
    %276 = vsyncpa [#allocation3], 1

</llo_original>
